<compile_context>
chip_gen: v7x
topology: tpu7x:2x2x1
jax: 0.10.0
libtpu: 0.0.40
codegen_flags: <defaults>
</compile_context>

<pallas_src>
import functools

import jax
import jax.numpy as jnp
from jax.experimental import pallas as pl
from jax.experimental.pallas import tpu as pltpu


LANE = 128  # TPU lane width; pad all last dims to a multiple of this.


def _round_up(x, m):
    return (x + m - 1) // m * m


def _cdiv(a, b):
    return -(-a // b)


def _lstm_fc_kernel(x_ref, wg_ref, bg_ref, wfc_ref, bfc_ref, out_ref):
    """Fused single-step LSTM (i,g,o gates only) + final Linear, one batch tile.

    x_ref   : (TB, F)   bf16   input features tile (pipelined over batch)
    wg_ref  : (F, 3*Hp) bf16   [W_i | W_g | W_o] stacked on the lane axis, each
                               gate zero-padded to Hp (multiple of 128)
    bg_ref  : (1, 3*Hp) f32    matching combined bias (b_ih + b_hh), zero-padded
    wfc_ref : (Hp, Op)  bf16   fc weight, transposed + zero-padded
    bfc_ref : (1, Op)   f32    fc bias, zero-padded
    out_ref : (TB, Op)  bf16   lane-dense padded output (real cols sliced outside)
    """
    x = x_ref[...]

    # Single MXU matmul for all three live gates (bf16 in, f32 accumulate).
    gates = jnp.dot(x, wg_ref[...], preferred_element_type=jnp.float32) + bg_ref[...]

    hp = gates.shape[-1] // 3  # static at trace time, multiple of 128
    g_i = gates[:, 0 * hp:1 * hp]
    g_g = gates[:, 1 * hp:2 * hp]
    g_o = gates[:, 2 * hp:3 * hp]

    # Elementwise math kept in f32 (EUP/VPU handle f32 on all generations).
    c1 = jax.nn.sigmoid(g_i) * jnp.tanh(g_g)     # forget * c0 term == 0, omitted
    h1 = jax.nn.sigmoid(g_o) * jnp.tanh(c1)      # padded lanes of h1 are exactly 0

    out = (
        jnp.dot(h1.astype(jnp.bfloat16), wfc_ref[...],
                preferred_element_type=jnp.float32)
        + bfc_ref[...]
    )
    out_ref[...] = out.astype(out_ref.dtype)     # bf16 store: halves HBM writeback


def prepare_params(w_ih, b_ih, b_hh, w_fc, b_fc):
    """One-time rearrangement of PyTorch-layout params into kernel layout.

    Call this ONCE (outside the hot path); the result is reused for every
    forward call, so no per-call transposes/reshapes/casts remain.

    w_ih : (4H, F)   nn.LSTM weight_ih_l0
    b_ih : (4H,)     nn.LSTM bias_ih_l0
    b_hh : (4H,)     nn.LSTM bias_hh_l0
    w_fc : (O, H)    nn.Linear weight
    b_fc : (O,)      nn.Linear bias
    """
    four_h, f_dim = w_ih.shape
    h_dim = four_h // 4
    o_dim = w_fc.shape[0]
    hp = _round_up(h_dim, LANE)
    op = _round_up(o_dim, LANE)

    w4 = w_ih.reshape(4, h_dim, f_dim).astype(jnp.float32)
    b4 = (b_ih + b_hh).reshape(4, h_dim).astype(jnp.float32)

    # PyTorch gate order: 0=input, 1=forget, 2=cell(g), 3=output.
    # Forget gate is dead (c0 == 0) -> keep only (i, g, o).
    keep = (0, 2, 3)
    wg = jnp.zeros((f_dim, 3 * hp), jnp.float32)
    bg = jnp.zeros((1, 3 * hp), jnp.float32)
    for slot, gidx in enumerate(keep):
        wg = wg.at[:, slot * hp:slot * hp + h_dim].set(w4[gidx].T)
        bg = bg.at[:, slot * hp:slot * hp + h_dim].set(b4[gidx])

    wfc = jnp.zeros((hp, op), jnp.float32).at[:h_dim, :o_dim].set(
        w_fc.astype(jnp.float32).T
    )
    bfc = jnp.zeros((1, op), jnp.float32).at[:, :o_dim].set(
        b_fc.astype(jnp.float32)
    )

    # Weights streamed/held in bf16 (native MXU input); biases stay f32.
    wg = wg.astype(jnp.bfloat16)
    wfc = wfc.astype(jnp.bfloat16)

    meta = dict(F=f_dim, H=h_dim, O=o_dim, Hp=hp, Op=op)
    return (wg, bg, wfc, bfc), meta


@functools.partial(jax.jit, static_argnames=("o_dim", "tile_b"))
def lstm_regressor_forward(x, wg, bg, wfc, bfc, *, o_dim, tile_b=1024):
    """Forward pass with pre-prepared (kernel-layout) params.

    x : (B, F) float32. Returns (B, O) float32.
    """
    b_dim, f_dim = x.shape
    hp3 = wg.shape[1]
    hp = wfc.shape[0]
    op = wfc.shape[1]

    # Balanced batch tiling:
    #   * tiles are a multiple of 8 sublanes and at most ~tile_b rows
    #   * tile sizes divide the batch evenly (no ~all-junk trailing tile)
    #   * >= 2 grid steps whenever B > 8 so v7x's second TensorCore gets work
    n_tiles = max(1, _cdiv(b_dim, tile_b))
    if b_dim > 8:
        n_tiles = max(n_tiles, 2)
    tb = _round_up(_cdiv(b_dim, n_tiles), 8)
    b_pad = n_tiles * tb

    # Stream x in bf16: halves the main pipelined input DMA.
    x = x.astype(jnp.bfloat16)
    if b_pad != b_dim:
        x = jnp.pad(x, ((0, b_pad - b_dim), (0, 0)))

    grid = (n_tiles,)

    compiler_kwargs = dict(dimension_semantics=("parallel",))  # shards 2 TCs on v7x
    if tb > 1024:
        # Large-tile sweeps on v5e (16 MiB scoped default) need explicit headroom
        # for the (tb, 3*Hp) f32 gates temporary + c1/h1 intermediates.
        compiler_kwargs["vmem_limit_bytes"] = 48 * 1024 * 1024

    out_padded = pl.pallas_call(
        _lstm_fc_kernel,
        out_shape=jax.ShapeDtypeStruct((b_pad, op), jnp.bfloat16),
        grid=grid,
        in_specs=[
            pl.BlockSpec((tb, f_dim), lambda i: (i, 0)),     # x: pipelined over batch
            pl.BlockSpec((f_dim, hp3), lambda i: (0, 0)),    # weights: VMEM-resident
            pl.BlockSpec((1, hp3), lambda i: (0, 0)),
            pl.BlockSpec((hp, op), lambda i: (0, 0)),
            pl.BlockSpec((1, op), lambda i: (0, 0)),
        ],
        out_specs=pl.BlockSpec((tb, op), lambda i: (i, 0)),  # lane-dense bf16 store
        compiler_params=pltpu.CompilerParams(**compiler_kwargs),
    )(x, wg, bg, wfc, bfc)

    return out_padded[:b_dim, :o_dim].astype(jnp.float32)


def _reference_forward(x, w_ih, b_ih, b_hh, w_fc, b_fc):
    """Pure-JAX f32 reference of the original PyTorch math (for correctness check)."""
    gates = x @ w_ih.T + b_ih + b_hh
    g_i, g_f, g_g, g_o = jnp.split(gates, 4, axis=-1)
    c1 = jax.nn.sigmoid(g_i) * jnp.tanh(g_g)          # + sigmoid(g_f) * c0 (== 0)
    h1 = jax.nn.sigmoid(g_o) * jnp.tanh(c1)
    return h1 @ w_fc.T + b_fc


if __name__ == "__main__":
    # Small shapes consistent with the module: x is pre-flattened (B, F),
    # hidden_dim = 48, small output_dim.
    B, F, H, O = 16, 64, 48, 4

    key = jax.random.PRNGKey(0)
    kx, k1, k2, k3, k4, k5 = jax.random.split(key, 6)

    x = jax.random.normal(kx, (B, F), dtype=jnp.float32)

    # Deterministic init mimicking PyTorch's uniform(-1/sqrt(H), 1/sqrt(H)).
    bound = 1.0 / jnp.sqrt(jnp.float32(H))
    w_ih = jax.random.uniform(k1, (4 * H, F), jnp.float32, -bound, bound)
    b_ih = jax.random.uniform(k2, (4 * H,), jnp.float32, -bound, bound)
    b_hh = jax.random.uniform(k3, (4 * H,), jnp.float32, -bound, bound)
    w_fc = jax.random.uniform(k4, (O, H), jnp.float32, -bound, bound)
    b_fc = jax.random.uniform(k5, (O,), jnp.float32, -bound, bound)

    # One-time param preparation (hoisted out of the per-call path).
    (wg, bg, wfc, bfc), meta = prepare_params(w_ih, b_ih, b_hh, w_fc, b_fc)

    # tile_b=8 here so the tiny demo batch still exercises a >1 grid.
    out = lstm_regressor_forward(x, wg, bg, wfc, bfc, o_dim=meta["O"], tile_b=8)
    out = jax.block_until_ready(out)

    ref = _reference_forward(x, w_ih, b_ih, b_hh, w_fc, b_fc)
    assert out.shape == (B, O)
    # bf16 streaming of x/weights + bf16 output store (f32 accumulation inside)
    # quantizes slightly vs the pure-f32 reference.
    assert jnp.allclose(out, ref, atol=2e-2, rtol=2e-2), "mismatch vs reference"

    print("KERNEL_OK")
</pallas_src>

<mosaic_0001>
module attributes {stable_mosaic.version = 11 : i64} {
  func.func @_lstm_fc_kernel(%arg0: i32, %arg1: memref<8x64xbf16, #tpu.memory_space<vmem>>, %arg2: memref<64x384xbf16, #tpu.memory_space<vmem>>, %arg3: memref<1x384xf32, #tpu.memory_space<vmem>>, %arg4: memref<128x128xbf16, #tpu.memory_space<vmem>>, %arg5: memref<1x128xf32, #tpu.memory_space<vmem>>, %arg6: memref<8x128xbf16, #tpu.memory_space<vmem>>) attributes {dimension_semantics = [#tpu.dimension_semantics<parallel>], iteration_bounds = array<i64: 2>, scalar_prefetch = 0 : i64, scratch_operands = 0 : i64, tpu.core_type = #tpu.core_type<tc>, window_params = [{transform_indices = @transform_0, window_bounds = array<i64: 8, 64>}, {pipeline_mode = #tpu.pipeline_mode<synchronous>, transform_indices = @transform_1, window_bounds = array<i64: 64, 384>}, {pipeline_mode = #tpu.pipeline_mode<synchronous>, transform_indices = @transform_2, window_bounds = array<i64: 1, 384>}, {pipeline_mode = #tpu.pipeline_mode<synchronous>, transform_indices = @transform_3, window_bounds = array<i64: 128, 128>}, {pipeline_mode = #tpu.pipeline_mode<synchronous>, transform_indices = @transform_4, window_bounds = array<i64: 1, 128>}, {transform_indices = @transform_5, window_bounds = array<i64: 8, 128>}]} {
    %c0 = arith.constant 0 : index
    %c0_0 = arith.constant 0 : index
    %0 = vector.load %arg1[%c0, %c0_0] : memref<8x64xbf16, #tpu.memory_space<vmem>>, vector<8x64xbf16>
    %c0_1 = arith.constant 0 : index
    %c0_2 = arith.constant 0 : index
    %1 = vector.load %arg2[%c0_1, %c0_2] : memref<64x384xbf16, #tpu.memory_space<vmem>>, vector<64x384xbf16>
    %cst = arith.constant dense<0.000000e+00> : vector<8x384xf32>
    %2 = tpu.matmul %0, %1, %cst {dimension_numbers = #tpu.dot_dimension_numbers<[1], [0], [0], [1], [0, 0, 1, 1], [], []>} : vector<8x64xbf16>, vector<64x384xbf16>, vector<8x384xf32> -> vector<8x384xf32>
    %c0_3 = arith.constant 0 : index
    %c0_4 = arith.constant 0 : index
    %3 = vector.load %arg3[%c0_3, %c0_4] : memref<1x384xf32, #tpu.memory_space<vmem>>, vector<1x384xf32>
    %4 = vector.broadcast %3 : vector<1x384xf32> to vector<8x384xf32>
    %5 = arith.addf %2, %4 : vector<8x384xf32>
    %6 = vector.extract_strided_slice %5 {offsets = [0, 0], sizes = [8, 128], strides = [1, 1]} : vector<8x384xf32> to vector<8x128xf32>
    %7 = vector.extract_strided_slice %5 {offsets = [0, 128], sizes = [8, 128], strides = [1, 1]} : vector<8x384xf32> to vector<8x128xf32>
    %8 = vector.extract_strided_slice %5 {offsets = [0, 256], sizes = [8, 128], strides = [1, 1]} : vector<8x384xf32> to vector<8x128xf32>
    %9 = arith.negf %6 : vector<8x128xf32>
    %10 = math.exp %9 : vector<8x128xf32>
    %cst_5 = arith.constant 1.000000e+00 : f32
    %11 = vector.broadcast %cst_5 : f32 to vector<8x128xf32>
    %12 = arith.addf %11, %10 : vector<8x128xf32>
    %13 = arith.divf %11, %12 : vector<8x128xf32>
    %14 = math.tanh %7 : vector<8x128xf32>
    %15 = arith.mulf %13, %14 : vector<8x128xf32>
    %16 = arith.negf %8 : vector<8x128xf32>
    %17 = math.exp %16 : vector<8x128xf32>
    %cst_6 = arith.constant 1.000000e+00 : f32
    %18 = vector.broadcast %cst_6 : f32 to vector<8x128xf32>
    %19 = arith.addf %18, %17 : vector<8x128xf32>
    %20 = arith.divf %18, %19 : vector<8x128xf32>
    %21 = math.tanh %15 : vector<8x128xf32>
    %22 = arith.mulf %20, %21 : vector<8x128xf32>
    %23 = arith.truncf %22 : vector<8x128xf32> to vector<8x128xbf16>
    %c0_7 = arith.constant 0 : index
    %c0_8 = arith.constant 0 : index
    %24 = vector.load %arg4[%c0_7, %c0_8] : memref<128x128xbf16, #tpu.memory_space<vmem>>, vector<128x128xbf16>
    %cst_9 = arith.constant dense<0.000000e+00> : vector<8x128xf32>
    %25 = tpu.matmul %23, %24, %cst_9 {dimension_numbers = #tpu.dot_dimension_numbers<[1], [0], [0], [1], [0, 0, 1, 1], [], []>} : vector<8x128xbf16>, vector<128x128xbf16>, vector<8x128xf32> -> vector<8x128xf32>
    %c0_10 = arith.constant 0 : index
    %c0_11 = arith.constant 0 : index
    %26 = vector.load %arg5[%c0_10, %c0_11] : memref<1x128xf32, #tpu.memory_space<vmem>>, vector<1x128xf32>
    %27 = vector.broadcast %26 : vector<1x128xf32> to vector<8x128xf32>
    %28 = arith.addf %25, %27 : vector<8x128xf32>
    %29 = arith.truncf %28 : vector<8x128xf32> to vector<8x128xbf16>
    %c0_12 = arith.constant 0 : index
    %c0_13 = arith.constant 0 : index
    %30 = vector.load %arg6[%c0_12, %c0_13] : memref<8x128xbf16, #tpu.memory_space<vmem>>, vector<8x128xbf16>
    tpu.vector_store %arg6[%c0_12, %c0_13], %29 {strides = array<i32>} : memref<8x128xbf16, #tpu.memory_space<vmem>>, vector<8x128xbf16>,
    return
  }
  func.func @transform_0(%arg0: i32) -> (i32, i32) {
    %c0_i32 = arith.constant 0 : i32
    %c0_i32_0 = arith.constant 0 : i32
    return %arg0, %c0_i32 : i32, i32
  }
  func.func @transform_1(%arg0: i32) -> (i32, i32) {
    %c0_i32 = arith.constant 0 : i32
    %c0_i32_0 = arith.constant 0 : i32
    %c0_i32_1 = arith.constant 0 : i32
    return %c0_i32, %c0_i32_0 : i32, i32
  }
  func.func @transform_2(%arg0: i32) -> (i32, i32) {
    %c0_i32 = arith.constant 0 : i32
    %c0_i32_0 = arith.constant 0 : i32
    %c0_i32_1 = arith.constant 0 : i32
    return %c0_i32, %c0_i32_0 : i32, i32
  }
  func.func @transform_3(%arg0: i32) -> (i32, i32) {
    %c0_i32 = arith.constant 0 : i32
    %c0_i32_0 = arith.constant 0 : i32
    %c0_i32_1 = arith.constant 0 : i32
    return %c0_i32, %c0_i32_0 : i32, i32
  }
  func.func @transform_4(%arg0: i32) -> (i32, i32) {
    %c0_i32 = arith.constant 0 : i32
    %c0_i32_0 = arith.constant 0 : i32
    %c0_i32_1 = arith.constant 0 : i32
    return %c0_i32, %c0_i32_0 : i32, i32
  }
  func.func @transform_5(%arg0: i32) -> (i32, i32) {
    %c0_i32 = arith.constant 0 : i32
    %c0_i32_0 = arith.constant 0 : i32
    return %arg0, %c0_i32 : i32, i32
  }
}

</mosaic_0001>

<llo_original>
// kernel: lstm_regressor_forward.1
$region0: #{lstm_regressor_forward.1}
  #allocation0 [shape = 'u32[]', space=smem, size = 0x4, offset = 0x4, fixed_abs, tag = 'smem constant byte address 0x4 - core index']
  #allocation1 [shape = 'u32[144,128]{1,0:T(1,128)}', space=vmem, size = 0x12000, scoped, tag = 'internal scratch']
  %s0 = inlined_call_operand.vmem [shape: bf16[16,64], index: 0, kind: input, shape index: {}]
  %s1 = inlined_call_operand.hbm [shape: bf16[64,384], index: 1, kind: input, shape index: {}]
  %s2 = inlined_call_operand.vmem [shape: f32[1,384], index: 2, kind: input, shape index: {}]
  %s3 = inlined_call_operand.hbm [shape: bf16[128,128], index: 3, kind: input, shape index: {}]
  %s4 = inlined_call_operand.vmem [shape: f32[1,128], index: 4, kind: input, shape index: {}]
  %s5 = inlined_call_operand.vmem [shape: bf16[16,128], index: 5, kind: output, shape index: {}]
  %s6 = sld [smem:[#allocation0]]
  $region61: #{lstm_regressor_forward.1} parent=0
    _
  %s8 = ssub.s32 1, %s6
  %s9 = scalar_select 0, %s8, %s6
  $region1: #{lstm_regressor_forward.1} parent=0
    #allocation2 [shape = 'u8[49152]{0}', space=vmem, size = 0xc000, scoped, tag = 'input window, operand 1, single buffered']
    #allocation3 [shape = 's32[2]{0}', space=sflag, size = 0x8, scoped, tag = 'scoped memory for lstm_regressor_forward.1']
    #allocation4 [shape = 'u8[32768]{0}', space=vmem, size = 0x8000, scoped, tag = 'input window, operand 3, single buffered']
    #allocation5 [shape = 's32[1]{0}', space=sflag, size = 0x4, scoped, tag = 'scoped memory for lstm_regressor_forward.1']
    %10 = vsyncpa [#allocation3], 0
    %11 = vsyncpa [#allocation5], 0
    loop: start=0, step=1, limit=4
    $region2: #{lstm_regressor_forward.1} parent=1 // loop_pre_header
      _
    $region3: #{lstm_regressor_forward.1} parent=1 // loop_header
      %s13 = sphi 0, %s17
      %p14 = scmp.ge.s32.totalorder %s13, 4
      %s23 = sphi 0, %s25
      %s26 = sphi 0, %s23
      %s27 = sphi 0, %s26
      %s43 = sphi 0, %s27
      %s47 = sphi 0, %s47
      %s49 = sphi 0, %s47
      %s50 = sphi 0, %s49
      %s64 = sphi 0, %s50
      %s68 = sphi 0, %s68
      %s70 = sphi 0, %s68
      %s71 = sphi 0, %s70
      %s85 = sphi 0, %s71
      %s89 = sphi 0, %s89
      %s91 = sphi 0, %s89
      %s92 = sphi 0, %s91
      %s106 = sphi 0, %s92
      %s110 = sphi 0, %s110
      %s112 = sphi 0, %s110
      %s113 = sphi 0, %s112
      %s127 = sphi 0, %s113
      %s133 = sphi 0, %s135
      %s136 = sphi 0, %s133
      %s137 = sphi 0, %s136
      %s153 = sphi 0, %s137
    $region4: #{lstm_regressor_forward.1} parent=1 // loop_header_branch
      %16 = sbr.rel (%p14) target = $region8
    $region5: #{lstm_regressor_forward.1} parent=1 // loop_body
      %s18 = ssub.s32 %s13, 1
      %s19 = ssub.s32 %s13, 2
      %s20 = sadd.s32 %s13, 1
      %s21 = ssub.s32 %s13, %s20
      %p22 = scmp.eq.s32.totalorder %s21, 0
      %s24 = sadd.s32 %s23, 1
      %s25 = scalar_select %p22, %s23, %s24
      %p28 = pneg %p22
      %p29 = scmp.eq.s32.totalorder %s13, 1
      %p30 = por %p28, %p29
      %p31 = scmp.ne.s32.totalorder %s23, %s26
      %p32 = scmp.eq.s32.totalorder %s13, 0
      %p33 = por %p31, %p32
      %p34 = scmp.ne.s32.totalorder %s23, %s26
      %p35 = scmp.eq.s32.totalorder %s18, 1
      %p36 = por %p34, %p35
      %p37 = scmp.ne.s32.totalorder %s26, %s27
      %p38 = scmp.eq.s32.totalorder %s18, 0
      %p39 = por %p37, %p38
      %p40 = scmp.ne.s32.totalorder %s26, %s27
      %p41 = scmp.eq.s32.totalorder %s19, 1
      %p42 = por %p40, %p41
      %p44 = scmp.ne.s32.totalorder %s27, %s43
      %p45 = scmp.eq.s32.totalorder %s19, 0
      %p46 = por %p44, %p45
      %s48 = sadd.s32 %s47, 1
      %p51 = scmp.eq.s32.totalorder %s13, 1
      %p52 = scmp.ne.s32.totalorder %s47, %s49
      %p53 = scmp.eq.s32.totalorder %s13, 0
      %p54 = por %p52, %p53
      %p55 = scmp.ne.s32.totalorder %s47, %s49
      %p56 = scmp.eq.s32.totalorder %s18, 1
      %p57 = por %p55, %p56
      %p58 = scmp.ne.s32.totalorder %s49, %s50
      %p59 = scmp.eq.s32.totalorder %s18, 0
      %p60 = por %p58, %p59
      %p61 = scmp.ne.s32.totalorder %s49, %s50
      %p62 = scmp.eq.s32.totalorder %s19, 1
      %p63 = por %p61, %p62
      %p65 = scmp.ne.s32.totalorder %s50, %s64
      %p66 = scmp.eq.s32.totalorder %s19, 0
      %p67 = por %p65, %p66
      %s69 = sadd.s32 %s68, 1
      %p72 = scmp.eq.s32.totalorder %s13, 1
      %p73 = scmp.ne.s32.totalorder %s68, %s70
      %p74 = scmp.eq.s32.totalorder %s13, 0
      %p75 = por %p73, %p74
      %p76 = scmp.ne.s32.totalorder %s68, %s70
      %p77 = scmp.eq.s32.totalorder %s18, 1
      %p78 = por %p76, %p77
      %p79 = scmp.ne.s32.totalorder %s70, %s71
      %p80 = scmp.eq.s32.totalorder %s18, 0
      %p81 = por %p79, %p80
      %p82 = scmp.ne.s32.totalorder %s70, %s71
      %p83 = scmp.eq.s32.totalorder %s19, 1
      %p84 = por %p82, %p83
      %p86 = scmp.ne.s32.totalorder %s71, %s85
      %p87 = scmp.eq.s32.totalorder %s19, 0
      %p88 = por %p86, %p87
      %s90 = sadd.s32 %s89, 1
      %p93 = scmp.eq.s32.totalorder %s13, 1
      %p94 = scmp.ne.s32.totalorder %s89, %s91
      %p95 = scmp.eq.s32.totalorder %s13, 0
      %p96 = por %p94, %p95
      %p97 = scmp.ne.s32.totalorder %s89, %s91
      %p98 = scmp.eq.s32.totalorder %s18, 1
      %p99 = por %p97, %p98
      %p100 = scmp.ne.s32.totalorder %s91, %s92
      %p101 = scmp.eq.s32.totalorder %s18, 0
      %p102 = por %p100, %p101
      %p103 = scmp.ne.s32.totalorder %s91, %s92
      %p104 = scmp.eq.s32.totalorder %s19, 1
      %p105 = por %p103, %p104
      %p107 = scmp.ne.s32.totalorder %s92, %s106
      %p108 = scmp.eq.s32.totalorder %s19, 0
      %p109 = por %p107, %p108
      %s111 = sadd.s32 %s110, 1
      %p114 = scmp.eq.s32.totalorder %s13, 1
      %p115 = scmp.ne.s32.totalorder %s110, %s112
      %p116 = scmp.eq.s32.totalorder %s13, 0
      %p117 = por %p115, %p116
      %p118 = scmp.ne.s32.totalorder %s110, %s112
      %p119 = scmp.eq.s32.totalorder %s18, 1
      %p120 = por %p118, %p119
      %p121 = scmp.ne.s32.totalorder %s112, %s113
      %p122 = scmp.eq.s32.totalorder %s18, 0
      %p123 = por %p121, %p122
      %p124 = scmp.ne.s32.totalorder %s112, %s113
      %p125 = scmp.eq.s32.totalorder %s19, 1
      %p126 = por %p124, %p125
      %p128 = scmp.ne.s32.totalorder %s113, %s127
      %p129 = scmp.eq.s32.totalorder %s19, 0
      %p130 = por %p128, %p129
      %s131 = ssub.s32 %s13, %s20
      %p132 = scmp.eq.s32.totalorder %s131, 0
      %s134 = sadd.s32 %s133, 1
      %s135 = scalar_select %p132, %s133, %s134
      %p138 = pneg %p132
      %p139 = scmp.eq.s32.totalorder %s13, 1
      %p140 = por %p138, %p139
      %p141 = scmp.ne.s32.totalorder %s133, %s136
      %p142 = scmp.eq.s32.totalorder %s13, 0
      %p143 = por %p141, %p142
      %p144 = scmp.ne.s32.totalorder %s133, %s136
      %p145 = scmp.eq.s32.totalorder %s18, 1
      %p146 = por %p144, %p145
      %p147 = scmp.ne.s32.totalorder %s136, %s137
      %p148 = scmp.eq.s32.totalorder %s18, 0
      %p149 = por %p147, %p148
      %p150 = scmp.ne.s32.totalorder %s136, %s137
      %p151 = scmp.eq.s32.totalorder %s19, 1
      %p152 = por %p150, %p151
      %p154 = scmp.ne.s32.totalorder %s137, %s153
      %p155 = scmp.eq.s32.totalorder %s19, 0
      %p156 = por %p154, %p155
      %p157 = scmp.le.s32.totalorder 1, %s13
      %p158 = scmp.lt.s32.totalorder %s13, 3
      %p159 = pnand %p157, %p158
      %p160 = pneg %p159
      // Predicated region
      $region9: #{lstm_regressor_forward.1} parent=5 // pred_check
        _
      $region10: #{lstm_regressor_forward.1} parent=5 // pred_check_branch
        %162 = sbr.rel (%p159) target = $region12
      $region11: #{lstm_regressor_forward.1} parent=5 // pred_region
        %s163 = ssub.s32 %s13, 1
        // Predicated region
        $region13: #{lstm_regressor_forward.1} parent=11 // pred_check
          %p164 = pneg %p60
        $region14: #{lstm_regressor_forward.1} parent=11 // pred_check_branch
          %166 = sbr.rel (%p164) target = $region16
        $region15: #{lstm_regressor_forward.1} parent=11 // pred_region
          %s168 = ssub.s32 1536, 1536
          %169 = vsyncadd [#allocation3], %s168
          %s170 = sshll.u32 [#allocation2], 4
          %s171 = int_to_ptr.vmem [resolvable:$true] %s170
          %176 = dma.hbm_to_vmem [thread:$0]  %s1, 1536, %s171, [#allocation3], 192, 192, 12
        $region16: #{lstm_regressor_forward.1} parent=11 // pred_fallthru
          _
        // Predicated region
        $region17: #{lstm_regressor_forward.1} parent=11 // pred_check
          %p177 = pneg %p81
        $region18: #{lstm_regressor_forward.1} parent=11 // pred_check_branch
          %179 = sbr.rel (%p177) target = $region20
        $region19: #{lstm_regressor_forward.1} parent=11 // pred_region
          _
        $region20: #{lstm_regressor_forward.1} parent=11 // pred_fallthru
          _
        // Predicated region
        $region21: #{lstm_regressor_forward.1} parent=11 // pred_check
          %p180 = pneg %p102
        $region22: #{lstm_regressor_forward.1} parent=11 // pred_check_branch
          %182 = sbr.rel (%p180) target = $region24
        $region23: #{lstm_regressor_forward.1} parent=11 // pred_region
          %s184 = ssub.s32 1024, 1024
          %185 = vsyncadd [#allocation5], %s184
          %s186 = sshll.u32 [#allocation4], 4
          %s187 = int_to_ptr.vmem [resolvable:$true] %s186
          %192 = dma.hbm_to_vmem [thread:$0]  %s3, 1024, %s187, [#allocation5], 64, 64, 4
        $region24: #{lstm_regressor_forward.1} parent=11 // pred_fallthru
          _
        // Predicated region
        $region25: #{lstm_regressor_forward.1} parent=11 // pred_check
          %p193 = pneg %p123
        $region26: #{lstm_regressor_forward.1} parent=11 // pred_check_branch
          %195 = sbr.rel (%p193) target = $region28
        $region27: #{lstm_regressor_forward.1} parent=11 // pred_region
          _
        $region28: #{lstm_regressor_forward.1} parent=11 // pred_fallthru
          _
      $region12: #{lstm_regressor_forward.1} parent=5 // pred_fallthru
        _
      %p196 = scmp.lt.s32.totalorder %s13, 2
      // Predicated region
      $region29: #{lstm_regressor_forward.1} parent=5 // pred_check
        %p197 = pneg %p196
      $region30: #{lstm_regressor_forward.1} parent=5 // pred_check_branch
        %199 = sbr.rel (%p197) target = $region32
      $region31: #{lstm_regressor_forward.1} parent=5 // pred_region
        // Predicated region
        $region33: #{lstm_regressor_forward.1} parent=31 // pred_check
          %p200 = pneg %p33
        $region34: #{lstm_regressor_forward.1} parent=31 // pred_check_branch
          %202 = sbr.rel (%p200) target = $region36
        $region35: #{lstm_regressor_forward.1} parent=31 // pred_region
          %p203 = scmp.lt.s32.totalorder %s13, 1
          %s204 = scalar_select %p203, %s13, 1
          %s205 = smul.addr %s204, 4
          %s206 = scalar_lea.vmem %s0, %s205
        $region36: #{lstm_regressor_forward.1} parent=31 // pred_fallthru
          _
      $region32: #{lstm_regressor_forward.1} parent=5 // pred_fallthru
        _
      %p207 = scmp.le.s32.totalorder 1, %s13
      %p208 = scmp.lt.s32.totalorder %s13, 3
      %p209 = pnand %p207, %p208
      %p210 = pneg %p209
      // Predicated region
      $region37: #{lstm_regressor_forward.1} parent=5 // pred_check
        _
      $region38: #{lstm_regressor_forward.1} parent=5 // pred_check_branch
        %212 = sbr.rel (%p209) target = $region40
      $region39: #{lstm_regressor_forward.1} parent=5 // pred_region
        %s213 = ssub.s32 %s13, 1
        // Predicated region
        $region41: #{lstm_regressor_forward.1} parent=39 // pred_check
          %p214 = pneg %p60
        $region42: #{lstm_regressor_forward.1} parent=39 // pred_check_branch
          %216 = sbr.rel (%p214) target = $region44
        $region43: #{lstm_regressor_forward.1} parent=39 // pred_region
          %217 = dma.done [#allocation3], 1536
        $region44: #{lstm_regressor_forward.1} parent=39 // pred_fallthru
          _
        // Predicated region
        $region45: #{lstm_regressor_forward.1} parent=39 // pred_check
          %p218 = pneg %p102
        $region46: #{lstm_regressor_forward.1} parent=39 // pred_check_branch
          %220 = sbr.rel (%p218) target = $region48
        $region47: #{lstm_regressor_forward.1} parent=39 // pred_region
          %221 = dma.done [#allocation5], 1024
        $region48: #{lstm_regressor_forward.1} parent=39 // pred_fallthru
          _
        %p222 = scmp.lt.s32.totalorder %s18, 1
        %s223 = scalar_select %p222, %s18, 1
        %s224 = smul.addr %s223, 4
        %s225 = scalar_lea.vmem %s0, %s224
        %p226 = pneg %p39
        %p227 = pneg %p36
        %p228 = pneg %p60
        %p229 = pneg %p57
        %p230 = pneg %p81
        %p231 = pneg %p78
        %p232 = pneg %p102
        %p233 = pneg %p99
        %p234 = pneg %p123
        %p235 = pneg %p120
        %p236 = pneg %p149
        %p237 = pneg %p146
        %p238 = scmp.lt.s32.totalorder %s18, 1
        %s239 = scalar_select %p238, %s18, 1
        %s240 = smul.addr %s239, 4
        %s241 = scalar_lea.vmem %s5, %s240
        %p242 = scmp.lt.s32.totalorder %s18, 1
        %s243 = scalar_select %p242, %s18, 1
        %s244 = smul.addr %s243, 4
        %s245 = scalar_lea.vmem %s0, %s244
        %p246 = scmp.lt.s32.totalorder %s18, 1
        %s247 = scalar_select %p246, %s18, 1
        %s248 = smul.addr %s247, 4
        %s249 = scalar_lea.vmem %s5, %s248
        %v251 = vld [vmem:[%s245] sm:$0xf]
        %v252 = vld [vmem:[#allocation2] sm:$0xff]
        %v253 = vld [vmem:[#allocation2 + $0x8] sm:$0xf]
        %v254 = vld [vmem:[#allocation2 + $0xc] sm:$0xff]
        %v255 = vld [vmem:[#allocation2 + $0x14] sm:$0xf]
        %v256 = vld [vmem:[#allocation2 + $0x18] sm:$0xff]
        %v257 = vld [vmem:[#allocation2 + $0x20] sm:$0xf]
        %v258 = vld [vmem:[#allocation2 + $0x24] sm:$0xff]
        %v259 = vld [vmem:[#allocation2 + $0x2c] sm:$0xf]
        %v260 = vld [vmem:[#allocation2 + $0x30] sm:$0xff]
        %v261 = vld [vmem:[#allocation2 + $0x38] sm:$0xf]
        %v262 = vld [vmem:[#allocation2 + $0x3c] sm:$0xff]
        %v263 = vld [vmem:[#allocation2 + $0x44] sm:$0xf]
        %v264 = vld [vmem:[#allocation2 + $0x48] sm:$0xff]
        %v265 = vld [vmem:[#allocation2 + $0x50] sm:$0xf]
        %v266 = vld [vmem:[#allocation2 + $0x54] sm:$0xff]
        %v267 = vld [vmem:[#allocation2 + $0x5c] sm:$0xf]
        %v268 = vld [vmem:[%s2] sm:$0x7]
        %v270 = vlaneseq
        %v271 = vshrl.u32 %v270, 7
        %v272 = vsub.s32 0, %v271
        %v273 = vrot.slane %v268, %v272
        %v274 = vlaneseq
        %v275 = vshrl.u32 %v274, 7
        %v276 = vsub.s32 1, %v275
        %v277 = vrot.slane %v268, %v276
        %v278 = vlaneseq
        %v279 = vshrl.u32 %v278, 7
        %v280 = vsub.s32 2, %v279
        %v281 = vrot.slane %v268, %v280
        %v301 = vunpack.c.l.b16 %v252
        %v302 = vunpack.c.h.b16 %v252
        %v303 = vunpack.c.l.b16 %v253
        %v304 = vunpack.c.l.b16 %v254
        %v305 = vunpack.c.h.b16 %v254
        %v306 = vunpack.c.l.b16 %v255
        %v307 = vunpack.c.l.b16 %v256
        %v308 = vunpack.c.h.b16 %v256
        %v309 = vunpack.c.l.b16 %v257
        %v310 = vunpack.c.l.b16 %v258
        %v311 = vunpack.c.h.b16 %v258
        %v312 = vunpack.c.l.b16 %v259
        %v313 = vunpack.c.l.b16 %v260
        %v314 = vunpack.c.h.b16 %v260
        %v315 = vunpack.c.l.b16 %v261
        %v316 = vunpack.c.l.b16 %v262
        %v317 = vunpack.c.h.b16 %v262
        %v318 = vunpack.c.l.b16 %v263
        %v319 = vunpack.c.l.b16 %v264
        %v320 = vunpack.c.h.b16 %v264
        %v321 = vunpack.c.l.b16 %v265
        %v322 = vunpack.c.l.b16 %v266
        %v323 = vunpack.c.h.b16 %v266
        %v324 = vunpack.c.l.b16 %v267
        %v325 = vpack.c.b16 %v304, %v301
        %v326 = vpack.c.b16 %v305, %v302
        %v327 = vpack.c.b16 %v306, %v303
        %v328 = vpack.c.b16 %v310, %v307
        %v329 = vpack.c.b16 %v311, %v308
        %v330 = vpack.c.b16 %v312, %v309
        %v331 = vpack.c.b16 %v316, %v313
        %v332 = vpack.c.b16 %v317, %v314
        %v333 = vpack.c.b16 %v318, %v315
        %v334 = vpack.c.b16 %v322, %v319
        %v335 = vpack.c.b16 %v323, %v320
        %v336 = vpack.c.b16 %v324, %v321
        %vm349 = vcmask 523264
        %v351 = vsel %vm349, %v251, 0
        %353 = vmatprep.subr.bf16.mxu0 %v326
        %354 = vmatpush1.bf16.msra.mxu0 %v325
        %355 = vmatprep.subr.bf16.mxu0 %v329
        %356 = vmatpush1.bf16.msra.mxu0 %v328
        %357 = vmatprep.subr.bf16.mxu0 %v332
        %358 = vmatpush1.bf16.msra.mxu0 %v331
        %359 = vmatprep.subr.bf16.mxu0 %v335
        %360 = vmatpush1.bf16.msra.mxu0 %v334
        %361 = vmatprep.subr.bf16.mxu0 0
        %362 = vmatpush1.bf16.msra.mxu0 0
        %363 = vmatprep.subr.bf16.mxu0 0
        %364 = vmatpush1.bf16.msra.mxu0 0
        %365 = vmatprep.subr.bf16.mxu0 0
        %366 = vmatpush1.bf16.msra.mxu0 0
        %367 = vmatprep.subr.bf16.mxu0 0
        %368 = vmatpush1.bf16.msra.mxu0 0
        %369 = vmatprep.subr.bf16.mxu0 0
        %370 = vmatpush1.bf16.msra.mxu0 0
        %371 = vmatprep.subr.bf16.mxu0 0
        %372 = vmatpush1.bf16.msra.mxu0 0
        %373 = vmatprep.subr.bf16.mxu0 0
        %374 = vmatpush1.bf16.msra.mxu0 0
        %375 = vmatprep.subr.bf16.mxu0 0
        %376 = vmatpush1.bf16.msra.mxu0 0
        %377 = vmatprep.subr.bf16.mxu0 0
        %378 = vmatpush1.bf16.msra.mxu0 0
        %379 = vmatprep.subr.bf16.mxu0 0
        %380 = vmatpush1.bf16.msra.mxu0 0
        %381 = vmatprep.subr.bf16.mxu0 0
        %382 = vmatpush1.bf16.msra.mxu0 0
        %383 = vmatprep.subr.bf16.mxu0 0
        %384 = vmatpush1.bf16.msra.mxu0 0
        %385 = vmatprep.mubr.bf16.mxu0 0
        %386 = vmatmul.mubr.bf16.gmra.mrb[0].mxu0 %v351
        %v387 = vpop.f32.mrb[0].mxu0
        %v388 = vadd.f32 %v273, %v387
        %v389 = vpop.f32.mrb[0].mxu0
        %v390 = vadd.f32 %v277, %v389
        %v391 = vpop.f32.mrb[0].mxu0
        %v392 = vpop.f32.mrb[0].mxu0
        %393 = vdwg.mxu0
        %394 = vmatprep.subr.bf16.mxu0 0
        %395 = vmatpush1.bf16.msra.mxu0 %v327
        %396 = vmatprep.subr.bf16.mxu0 0
        %397 = vmatpush1.bf16.msra.mxu0 %v330
        %398 = vmatprep.subr.bf16.mxu0 0
        %399 = vmatpush1.bf16.msra.mxu0 %v333
        %400 = vmatprep.subr.bf16.mxu0 0
        %401 = vmatpush1.bf16.msra.mxu0 %v336
        %402 = vmatprep.subr.bf16.mxu0 0
        %403 = vmatpush1.bf16.msra.mxu0 0
        %404 = vmatprep.subr.bf16.mxu0 0
        %405 = vmatpush1.bf16.msra.mxu0 0
        %406 = vmatprep.subr.bf16.mxu0 0
        %407 = vmatpush1.bf16.msra.mxu0 0
        %408 = vmatprep.subr.bf16.mxu0 0
        %409 = vmatpush1.bf16.msra.mxu0 0
        %410 = vmatprep.subr.bf16.mxu0 0
        %411 = vmatpush1.bf16.msra.mxu0 0
        %412 = vmatprep.subr.bf16.mxu0 0
        %413 = vmatpush1.bf16.msra.mxu0 0
        %414 = vmatprep.subr.bf16.mxu0 0
        %415 = vmatpush1.bf16.msra.mxu0 0
        %416 = vmatprep.subr.bf16.mxu0 0
        %417 = vmatpush1.bf16.msra.mxu0 0
        %418 = vmatprep.subr.bf16.mxu0 0
        %419 = vmatpush1.bf16.msra.mxu0 0
        %420 = vmatprep.subr.bf16.mxu0 0
        %421 = vmatpush1.bf16.msra.mxu0 0
        %422 = vmatprep.subr.bf16.mxu0 0
        %423 = vmatpush1.bf16.msra.mxu0 0
        %424 = vmatprep.subr.bf16.mxu0 0
        %425 = vmatpush1.bf16.msra.mxu0 0
        %426 = vmatprep.mubr.bf16.mxu0 0
        %427 = vmatmul.mubr.bf16.gmra.mrb[0].mxu0 %v351
        %v428 = vpop.f32.mrb[0].mxu0
        %v429 = vadd.f32 %v281, %v428
        %v430 = vpop.f32.mrb[0].mxu0
        %v431 = vpop.f32.mrb[0].mxu0
        %v432 = vpop.f32.mrb[0].mxu0
        %433 = vdwg.mxu0
        %v434 = vxor.u32 %v388, 2147483648
        %v435 = vmul.f32 %v434, 1.442695
        %v436 = vpow.pop %v435
        %v437 = vadd.f32 %v436, 1.0
        %v438 = vrcp.pop %v437
        %v439 = vmul.f32 1.0, %v438
        %v440 = vtanh.pop %v390
        %v441 = vmul.f32 %v439, %v440
        %v442 = vxor.u32 %v429, 2147483648
        %v443 = vmul.f32 %v442, 1.442695
        %v444 = vpow.pop %v443
        %v445 = vadd.f32 %v444, 1.0
        %v446 = vrcp.pop %v445
        %v447 = vmul.f32 1.0, %v446
        %v448 = vtanh.pop %v441
        %v449 = vmul.f32 %v447, %v448
        %v450 = vpack.c.bf16 %v449, %v449
        %v451 = vld [vmem:[#allocation4] sm:$0xf]
        %v452 = vld [vmem:[#allocation4 + $0x4] sm:$0xf]
        %v453 = vld [vmem:[#allocation4 + $0x8] sm:$0xf]
        %v454 = vld [vmem:[#allocation4 + $0xc] sm:$0xf]
        %v455 = vld [vmem:[#allocation4 + $0x10] sm:$0xf]
        %v456 = vld [vmem:[#allocation4 + $0x14] sm:$0xf]
        %v457 = vld [vmem:[#allocation4 + $0x18] sm:$0xf]
        %v458 = vld [vmem:[#allocation4 + $0x1c] sm:$0xf]
        %v459 = vld [vmem:[#allocation4 + $0x20] sm:$0xf]
        %v460 = vld [vmem:[#allocation4 + $0x24] sm:$0xf]
        %v461 = vld [vmem:[#allocation4 + $0x28] sm:$0xf]
        %v462 = vld [vmem:[#allocation4 + $0x2c] sm:$0xf]
        %v463 = vld [vmem:[#allocation4 + $0x30] sm:$0xf]
        %v464 = vld [vmem:[#allocation4 + $0x34] sm:$0xf]
        %v465 = vld [vmem:[#allocation4 + $0x38] sm:$0xf]
        %v466 = vld [vmem:[#allocation4 + $0x3c] sm:$0xf]
        %v467 = vld [vmem:[%s4] sm:$0x1]
        %v469 = vlaneseq
        %v470 = vshrl.u32 %v469, 7
        %v471 = vsub.s32 0, %v470
        %v472 = vrot.slane %v467, %v471
        %v490 = vunpack.c.l.b16 %v451
        %v491 = vunpack.c.l.b16 %v452
        %v492 = vunpack.c.l.b16 %v453
        %v493 = vunpack.c.l.b16 %v454
        %v494 = vunpack.c.l.b16 %v455
        %v495 = vunpack.c.l.b16 %v456
        %v496 = vunpack.c.l.b16 %v457
        %v497 = vunpack.c.l.b16 %v458
        %v498 = vunpack.c.l.b16 %v459
        %v499 = vunpack.c.l.b16 %v460
        %v500 = vunpack.c.l.b16 %v461
        %v501 = vunpack.c.l.b16 %v462
        %v502 = vunpack.c.l.b16 %v463
        %v503 = vunpack.c.l.b16 %v464
        %v504 = vunpack.c.l.b16 %v465
        %v505 = vunpack.c.l.b16 %v466
        %v506 = vpack.c.b16 %v491, %v490
        %v507 = vpack.c.b16 %v493, %v492
        %v508 = vpack.c.b16 %v495, %v494
        %v509 = vpack.c.b16 %v497, %v496
        %v510 = vpack.c.b16 %v499, %v498
        %v511 = vpack.c.b16 %v501, %v500
        %v512 = vpack.c.b16 %v503, %v502
        %v513 = vpack.c.b16 %v505, %v504
        %522 = vmatprep.subr.bf16.mxu0 0
        %523 = vmatpush1.bf16.msra.mxu0 %v506
        %524 = vmatprep.subr.bf16.mxu0 0
        %525 = vmatpush1.bf16.msra.mxu0 %v507
        %526 = vmatprep.subr.bf16.mxu0 0
        %527 = vmatpush1.bf16.msra.mxu0 %v508
        %528 = vmatprep.subr.bf16.mxu0 0
        %529 = vmatpush1.bf16.msra.mxu0 %v509
        %530 = vmatprep.subr.bf16.mxu0 0
        %531 = vmatpush1.bf16.msra.mxu0 %v510
        %532 = vmatprep.subr.bf16.mxu0 0
        %533 = vmatpush1.bf16.msra.mxu0 %v511
        %534 = vmatprep.subr.bf16.mxu0 0
        %535 = vmatpush1.bf16.msra.mxu0 %v512
        %536 = vmatprep.subr.bf16.mxu0 0
        %537 = vmatpush1.bf16.msra.mxu0 %v513
        %538 = vmatprep.subr.bf16.mxu0 0
        %539 = vmatpush1.bf16.msra.mxu0 0
        %540 = vmatprep.subr.bf16.mxu0 0
        %541 = vmatpush1.bf16.msra.mxu0 0
        %542 = vmatprep.subr.bf16.mxu0 0
        %543 = vmatpush1.bf16.msra.mxu0 0
        %544 = vmatprep.subr.bf16.mxu0 0
        %545 = vmatpush1.bf16.msra.mxu0 0
        %546 = vmatprep.subr.bf16.mxu0 0
        %547 = vmatpush1.bf16.msra.mxu0 0
        %548 = vmatprep.subr.bf16.mxu0 0
        %549 = vmatpush1.bf16.msra.mxu0 0
        %550 = vmatprep.subr.bf16.mxu0 0
        %551 = vmatpush1.bf16.msra.mxu0 0
        %552 = vmatprep.subr.bf16.mxu0 0
        %553 = vmatpush1.bf16.msra.mxu0 0
        %554 = vmatprep.mubr.bf16.mxu0 0
        %555 = vmatmul.mubr.bf16.gmra.mrb[0].mxu0 %v450
        %v556 = vpop.f32.mrb[0].mxu0
        %v557 = vadd.f32 %v472, %v556
        %v558 = vpop.f32.mrb[0].mxu0
        %v559 = vpop.f32.mrb[0].mxu0
        %v560 = vpop.f32.mrb[0].mxu0
        %561 = vdwg.mxu0
        %v562 = vpack.c.bf16 %v557, %v557
        %563 = vst [vmem:[%s249] sm:$0xf] %v562
        %p564 = scmp.lt.s32.totalorder %s18, 1
        %s565 = scalar_select %p564, %s18, 1
        %s566 = smul.addr %s565, 4
        %s567 = scalar_lea.vmem %s5, %s566
        // Predicated region
        $region49: #{lstm_regressor_forward.1} parent=39 // pred_check
          %p568 = pneg %p146
        $region50: #{lstm_regressor_forward.1} parent=39 // pred_check_branch
          %570 = sbr.rel (%p568) target = $region52
        $region51: #{lstm_regressor_forward.1} parent=39 // pred_region
          _
        $region52: #{lstm_regressor_forward.1} parent=39 // pred_fallthru
          _
      $region40: #{lstm_regressor_forward.1} parent=5 // pred_fallthru
        _
      %p571 = scmp.le.s32.totalorder 2, %s13
      // Predicated region
      $region53: #{lstm_regressor_forward.1} parent=5 // pred_check
        %p572 = pneg %p571
      $region54: #{lstm_regressor_forward.1} parent=5 // pred_check_branch
        %574 = sbr.rel (%p572) target = $region56
      $region55: #{lstm_regressor_forward.1} parent=5 // pred_region
        %s575 = ssub.s32 %s13, 2
        // Predicated region
        $region57: #{lstm_regressor_forward.1} parent=55 // pred_check
          %p576 = pneg %p152
        $region58: #{lstm_regressor_forward.1} parent=55 // pred_check_branch
          %578 = sbr.rel (%p576) target = $region60
        $region59: #{lstm_regressor_forward.1} parent=55 // pred_region
          %p579 = scmp.lt.s32.totalorder %s19, 1
          %s580 = scalar_select %p579, %s19, 1
          %s581 = smul.addr %s580, 4
          %s582 = scalar_lea.vmem %s5, %s581
        $region60: #{lstm_regressor_forward.1} parent=55 // pred_fallthru
          _
      $region56: #{lstm_regressor_forward.1} parent=5 // pred_fallthru
        _
    $region6: #{lstm_regressor_forward.1} parent=1 // loop_footer
      %s17 = sadd.s32 1, %s13
    $region7: #{lstm_regressor_forward.1} parent=1 // loop_footer_branch
      %12 = sbr.rel target = $region3
    $region8: #{lstm_regressor_forward.1} parent=1 // loop_exit
      _
    %583 = vsyncpa [#allocation3], 1
    %s584 = scalar_lea.sflag [#allocation3], 1
    %585 = vsyncpa %s584, 1
    %586 = vsyncpa [#allocation5], 1

</llo_original>
